<compile_context>
chip_gen: v5e
topology: v5e:2x2
jax: 0.10.0
libtpu: 0.0.40
codegen_flags: <defaults>
</compile_context>

<pallas_src>
import jax
import jax.numpy as jnp
from jax.experimental import pallas as pl
from jax.experimental.pallas import tpu as pltpu


# ---------------------------------------------------------------------------
# Kernel: logits = x_flat @ W_big + b_big ; per-timestep LogSoftmax ; 1 store
# ---------------------------------------------------------------------------
def make_fused_kernel(S, O):
    def kernel(x_ref, w_ref, b_ref, o_ref):
        # One MXU matmul over the whole batch block: (bb, S*D) @ (S*D, S*O).
        logits = (
            jnp.dot(x_ref[...], w_ref[...], preferred_element_type=jnp.float32)
            + b_ref[...]
        )
        # Per-timestep, numerically-stable LogSoftmax over the O class columns.
        # Static slices; the small reductions go to the (otherwise idle) XLU.
        pieces = []
        for t in range(S):
            z = logits[:, t * O:(t + 1) * O]
            m = jnp.max(z, axis=-1, keepdims=True)
            zz = z - m
            lse = jnp.log(jnp.sum(jnp.exp(zz), axis=-1, keepdims=True))
            pieces.append(zz - lse)
        # Re-assemble the full lane width -> ONE unmasked, lane-dense store.
        o_ref[...] = jnp.concatenate(pieces, axis=-1)

    return kernel


# ---------------------------------------------------------------------------
# Trace-time affine composition (parameters only — valid precompute)
# ---------------------------------------------------------------------------
def _layer_affine(wx, wh, b, S):
    """Affine map Z_flat(S*Din) -> H_flat(S*H) for one (linear) RNNSubLayer.

    h_t = sum_{s<=t} (x_s @ wx + b) @ wh^{t-s}   (zero initial hidden state)
    => H_flat = Z_flat @ A + c with A block (s,t) = wx @ wh^{t-s} for t>=s.
    """
    Din, H = wx.shape
    f32 = jnp.float32
    pows = [jnp.eye(H, dtype=f32)]
    for _ in range(S - 1):
        pows.append(pows[-1] @ wh)
    zero = jnp.zeros((Din, H), f32)
    rows = []
    for s in range(S):
        row = [(wx @ pows[t - s]) if t >= s else zero for t in range(S)]
        rows.append(jnp.concatenate(row, axis=1))
    A = jnp.concatenate(rows, axis=0)                     # (S*Din, S*H)
    acc = jnp.zeros((1, H), f32)
    c_blocks = []
    for t in range(S):
        acc = acc + b @ pows[t]                           # sum_{k<=t} b @ wh^k
        c_blocks.append(acc)
    c = jnp.concatenate(c_blocks, axis=1)                 # (1, S*H)
    return A, c


def compose_affine(params, S):
    """Compose all RNN layers + fc into W_big:(S*D,S*O), b_big:(1,S*O)."""
    rnn = params["rnn"]
    W, c = _layer_affine(*rnn[0], S)
    for (wx, wh, b) in rnn[1:]:
        A, cl = _layer_affine(wx, wh, b, S)
        c = c @ A + cl
        W = W @ A
    fc_w, fc_b = params["fc_w"], params["fc_b"]
    F = jnp.kron(jnp.eye(S, dtype=jnp.float32), fc_w)     # block-diag (S*H,S*O)
    W = W @ F
    c = c @ F + jnp.tile(fc_b, (1, S))
    return W, c


# ---------------------------------------------------------------------------
# Wrapper
# ---------------------------------------------------------------------------
def multilayer_rnn_forward(token_ids, params, *, batch_block=None,
                           compute_dtype=jnp.float32):
    """token_ids: (B, S) int32 -> log-probs (B, S, dim_output)."""
    B, S = token_ids.shape
    D = params["embedding"].shape[1]
    O = params["fc_w"].shape[1]

    bb = B if batch_block is None else batch_block
    assert B % bb == 0, "batch_block must divide batch"
    assert bb == B or bb % 8 == 0, "batch blocks must be a multiple of 8 rows"
    nb = B // bb

    # Parameter-only precompute (in production: do once and cache).
    W_big, b_big = compose_affine(params, S)               # (S*D,S*O), (1,S*O)

    # Embedding gather (XLA) straight into the batch-major, time-flat layout.
    x = jnp.take(params["embedding"], token_ids, axis=0).reshape(B, S * D)

    x = x.astype(compute_dtype)
    W_big = W_big.astype(compute_dtype)                    # bias stays f32

    out = pl.pallas_call(
        make_fused_kernel(S, O),
        out_shape=jax.ShapeDtypeStruct((B, S * O), jnp.float32),
        grid=(nb,),
        in_specs=[
            pl.BlockSpec((bb, S * D), lambda i: (i, 0)),
            pl.BlockSpec((S * D, S * O), lambda i: (0, 0)),
            pl.BlockSpec((1, S * O), lambda i: (0, 0)),
        ],
        out_specs=pl.BlockSpec((bb, S * O), lambda i: (i, 0)),
        compiler_params=pltpu.CompilerParams(
            dimension_semantics=("parallel",)),
    )(x, W_big, b_big)

    # Free reshape (no data movement): (B, S*O) -> (B, S, O).
    return out.reshape(B, S, O)


# ---------------------------------------------------------------------------
# Pure-JAX reference (mirrors the PyTorch forward) for a correctness check
# ---------------------------------------------------------------------------
def reference_forward(token_ids, params):
    emb = jnp.take(params["embedding"], token_ids, axis=0)   # (B, S, D)
    B, S, _ = emb.shape
    x = emb
    for (wx, wh, b) in params["rnn"]:
        H = wh.shape[0]
        h = jnp.zeros((B, H), jnp.float32)
        outs = []
        for i in range(S):
            h = x[:, i, :] @ wx + h @ wh + b[0]
            outs.append(h[:, None, :])
        x = jnp.concatenate(outs, axis=1)
    logits = x @ params["fc_w"] + params["fc_b"][0]
    return jax.nn.log_softmax(logits, axis=-1)


# ---------------------------------------------------------------------------
# Main
# ---------------------------------------------------------------------------
if __name__ == "__main__":
    # Small, module-consistent shapes: seq*dim_output = 128 makes the output
    # slab exactly one lane width; seq*dim_input = 256 is the matmul K dim.
    batch = 8
    seq = 8
    vocab = 64
    dim_input = 32
    dim_hidden = 32
    dim_output = 16
    num_layers = 2

    key = jax.random.PRNGKey(0)
    keys = jax.random.split(key, 3 + 3 * num_layers)

    embedding = jax.random.normal(keys[0], (vocab, dim_input), jnp.float32) * 0.1

    rnn_params = []
    for layer in range(num_layers):
        in_size = dim_input if layer == 0 else dim_hidden
        kwx, kwh, kb = keys[1 + 3 * layer: 4 + 3 * layer]
        scale = (2.0 / (in_size + dim_hidden + dim_hidden)) ** 0.5
        wx = jax.random.normal(kwx, (in_size, dim_hidden), jnp.float32) * scale
        wh = jax.random.normal(kwh, (dim_hidden, dim_hidden), jnp.float32) * scale
        b = jax.random.normal(kb, (1, dim_hidden), jnp.float32) * 0.01
        rnn_params.append((wx, wh, b))

    fc_scale = (2.0 / (dim_hidden + dim_output)) ** 0.5
    fc_w = jax.random.normal(keys[-2], (dim_hidden, dim_output), jnp.float32) * fc_scale
    fc_b = jax.random.normal(keys[-1], (1, dim_output), jnp.float32) * 0.01

    params = {"embedding": embedding, "rnn": rnn_params,
              "fc_w": fc_w, "fc_b": fc_b}

    token_ids = jax.random.randint(
        jax.random.PRNGKey(42), (batch, seq), 0, vocab, jnp.int32)

    # On v7x, pass batch_block=B//2 (blocks a multiple of 8 rows, >=128 ideal)
    # so the "parallel" grid axis shards across the two TensorCores.
    out = multilayer_rnn_forward(token_ids, params)
    out = jax.block_until_ready(out)

    ref = reference_forward(token_ids, params)
    assert out.shape == (batch, seq, dim_output), out.shape
    err = float(jnp.max(jnp.abs(out - ref)))
    assert err < 1e-4, err

    print("KERNEL_OK")
</pallas_src>

<mosaic_0001>
module attributes {stable_mosaic.version = 11 : i64} {
  func.func @kernel(%arg0: i32, %arg1: memref<8x256xf32, #tpu.memory_space<vmem>>, %arg2: memref<256x128xf32, #tpu.memory_space<vmem>>, %arg3: memref<1x128xf32, #tpu.memory_space<vmem>>, %arg4: memref<8x128xf32, #tpu.memory_space<vmem>>) attributes {dimension_semantics = [#tpu.dimension_semantics<parallel>], iteration_bounds = array<i64: 1>, scalar_prefetch = 0 : i64, scratch_operands = 0 : i64, tpu.core_type = #tpu.core_type<tc>, window_params = [{transform_indices = @transform_0, window_bounds = array<i64: 8, 256>}, {pipeline_mode = #tpu.pipeline_mode<synchronous>, transform_indices = @transform_1, window_bounds = array<i64: 256, 128>}, {pipeline_mode = #tpu.pipeline_mode<synchronous>, transform_indices = @transform_2, window_bounds = array<i64: 1, 128>}, {transform_indices = @transform_3, window_bounds = array<i64: 8, 128>}]} {
    %c0 = arith.constant 0 : index
    %c0_0 = arith.constant 0 : index
    %0 = vector.load %arg1[%c0, %c0_0] : memref<8x256xf32, #tpu.memory_space<vmem>>, vector<8x256xf32>
    %c0_1 = arith.constant 0 : index
    %c0_2 = arith.constant 0 : index
    %1 = vector.load %arg2[%c0_1, %c0_2] : memref<256x128xf32, #tpu.memory_space<vmem>>, vector<256x128xf32>
    %cst = arith.constant dense<0.000000e+00> : vector<8x128xf32>
    %2 = tpu.matmul %0, %1, %cst {dimension_numbers = #tpu.dot_dimension_numbers<[1], [0], [0], [1], [0, 0, 1, 1], [], []>} : vector<8x256xf32>, vector<256x128xf32>, vector<8x128xf32> -> vector<8x128xf32>
    %c0_3 = arith.constant 0 : index
    %c0_4 = arith.constant 0 : index
    %3 = vector.load %arg3[%c0_3, %c0_4] : memref<1x128xf32, #tpu.memory_space<vmem>>, vector<1x128xf32>
    %4 = vector.broadcast %3 : vector<1x128xf32> to vector<8x128xf32>
    %5 = arith.addf %2, %4 : vector<8x128xf32>
    %6 = vector.extract_strided_slice %5 {offsets = [0, 0], sizes = [8, 16], strides = [1, 1]} : vector<8x128xf32> to vector<8x16xf32>
    %cst_5 = arith.constant dense<0xFF800000> : vector<8xf32>
    %7 = vector.multi_reduction <maximumf>, %6, %cst_5 [1] : vector<8x16xf32> to vector<8xf32>
    %8 = vector.shape_cast %7 : vector<8xf32> to vector<8x1xf32>
    %9 = vector.broadcast %8 : vector<8x1xf32> to vector<8x16xf32>
    %10 = arith.subf %6, %9 : vector<8x16xf32>
    %11 = math.exp %10 : vector<8x16xf32>
    %cst_6 = arith.constant dense<0.000000e+00> : vector<8xf32>
    %12 = vector.multi_reduction <add>, %11, %cst_6 [1] : vector<8x16xf32> to vector<8xf32>
    %13 = vector.shape_cast %12 : vector<8xf32> to vector<8x1xf32>
    %14 = math.log %13 : vector<8x1xf32>
    %15 = vector.broadcast %14 : vector<8x1xf32> to vector<8x16xf32>
    %16 = arith.subf %10, %15 : vector<8x16xf32>
    %17 = vector.extract_strided_slice %5 {offsets = [0, 16], sizes = [8, 16], strides = [1, 1]} : vector<8x128xf32> to vector<8x16xf32>
    %cst_7 = arith.constant dense<0xFF800000> : vector<8xf32>
    %18 = vector.multi_reduction <maximumf>, %17, %cst_7 [1] : vector<8x16xf32> to vector<8xf32>
    %19 = vector.shape_cast %18 : vector<8xf32> to vector<8x1xf32>
    %20 = vector.broadcast %19 : vector<8x1xf32> to vector<8x16xf32>
    %21 = arith.subf %17, %20 : vector<8x16xf32>
    %22 = math.exp %21 : vector<8x16xf32>
    %cst_8 = arith.constant dense<0.000000e+00> : vector<8xf32>
    %23 = vector.multi_reduction <add>, %22, %cst_8 [1] : vector<8x16xf32> to vector<8xf32>
    %24 = vector.shape_cast %23 : vector<8xf32> to vector<8x1xf32>
    %25 = math.log %24 : vector<8x1xf32>
    %26 = vector.broadcast %25 : vector<8x1xf32> to vector<8x16xf32>
    %27 = arith.subf %21, %26 : vector<8x16xf32>
    %28 = vector.extract_strided_slice %5 {offsets = [0, 32], sizes = [8, 16], strides = [1, 1]} : vector<8x128xf32> to vector<8x16xf32>
    %cst_9 = arith.constant dense<0xFF800000> : vector<8xf32>
    %29 = vector.multi_reduction <maximumf>, %28, %cst_9 [1] : vector<8x16xf32> to vector<8xf32>
    %30 = vector.shape_cast %29 : vector<8xf32> to vector<8x1xf32>
    %31 = vector.broadcast %30 : vector<8x1xf32> to vector<8x16xf32>
    %32 = arith.subf %28, %31 : vector<8x16xf32>
    %33 = math.exp %32 : vector<8x16xf32>
    %cst_10 = arith.constant dense<0.000000e+00> : vector<8xf32>
    %34 = vector.multi_reduction <add>, %33, %cst_10 [1] : vector<8x16xf32> to vector<8xf32>
    %35 = vector.shape_cast %34 : vector<8xf32> to vector<8x1xf32>
    %36 = math.log %35 : vector<8x1xf32>
    %37 = vector.broadcast %36 : vector<8x1xf32> to vector<8x16xf32>
    %38 = arith.subf %32, %37 : vector<8x16xf32>
    %39 = vector.extract_strided_slice %5 {offsets = [0, 48], sizes = [8, 16], strides = [1, 1]} : vector<8x128xf32> to vector<8x16xf32>
    %cst_11 = arith.constant dense<0xFF800000> : vector<8xf32>
    %40 = vector.multi_reduction <maximumf>, %39, %cst_11 [1] : vector<8x16xf32> to vector<8xf32>
    %41 = vector.shape_cast %40 : vector<8xf32> to vector<8x1xf32>
    %42 = vector.broadcast %41 : vector<8x1xf32> to vector<8x16xf32>
    %43 = arith.subf %39, %42 : vector<8x16xf32>
    %44 = math.exp %43 : vector<8x16xf32>
    %cst_12 = arith.constant dense<0.000000e+00> : vector<8xf32>
    %45 = vector.multi_reduction <add>, %44, %cst_12 [1] : vector<8x16xf32> to vector<8xf32>
    %46 = vector.shape_cast %45 : vector<8xf32> to vector<8x1xf32>
    %47 = math.log %46 : vector<8x1xf32>
    %48 = vector.broadcast %47 : vector<8x1xf32> to vector<8x16xf32>
    %49 = arith.subf %43, %48 : vector<8x16xf32>
    %50 = vector.extract_strided_slice %5 {offsets = [0, 64], sizes = [8, 16], strides = [1, 1]} : vector<8x128xf32> to vector<8x16xf32>
    %cst_13 = arith.constant dense<0xFF800000> : vector<8xf32>
    %51 = vector.multi_reduction <maximumf>, %50, %cst_13 [1] : vector<8x16xf32> to vector<8xf32>
    %52 = vector.shape_cast %51 : vector<8xf32> to vector<8x1xf32>
    %53 = vector.broadcast %52 : vector<8x1xf32> to vector<8x16xf32>
    %54 = arith.subf %50, %53 : vector<8x16xf32>
    %55 = math.exp %54 : vector<8x16xf32>
    %cst_14 = arith.constant dense<0.000000e+00> : vector<8xf32>
    %56 = vector.multi_reduction <add>, %55, %cst_14 [1] : vector<8x16xf32> to vector<8xf32>
    %57 = vector.shape_cast %56 : vector<8xf32> to vector<8x1xf32>
    %58 = math.log %57 : vector<8x1xf32>
    %59 = vector.broadcast %58 : vector<8x1xf32> to vector<8x16xf32>
    %60 = arith.subf %54, %59 : vector<8x16xf32>
    %61 = vector.extract_strided_slice %5 {offsets = [0, 80], sizes = [8, 16], strides = [1, 1]} : vector<8x128xf32> to vector<8x16xf32>
    %cst_15 = arith.constant dense<0xFF800000> : vector<8xf32>
    %62 = vector.multi_reduction <maximumf>, %61, %cst_15 [1] : vector<8x16xf32> to vector<8xf32>
    %63 = vector.shape_cast %62 : vector<8xf32> to vector<8x1xf32>
    %64 = vector.broadcast %63 : vector<8x1xf32> to vector<8x16xf32>
    %65 = arith.subf %61, %64 : vector<8x16xf32>
    %66 = math.exp %65 : vector<8x16xf32>
    %cst_16 = arith.constant dense<0.000000e+00> : vector<8xf32>
    %67 = vector.multi_reduction <add>, %66, %cst_16 [1] : vector<8x16xf32> to vector<8xf32>
    %68 = vector.shape_cast %67 : vector<8xf32> to vector<8x1xf32>
    %69 = math.log %68 : vector<8x1xf32>
    %70 = vector.broadcast %69 : vector<8x1xf32> to vector<8x16xf32>
    %71 = arith.subf %65, %70 : vector<8x16xf32>
    %72 = vector.extract_strided_slice %5 {offsets = [0, 96], sizes = [8, 16], strides = [1, 1]} : vector<8x128xf32> to vector<8x16xf32>
    %cst_17 = arith.constant dense<0xFF800000> : vector<8xf32>
    %73 = vector.multi_reduction <maximumf>, %72, %cst_17 [1] : vector<8x16xf32> to vector<8xf32>
    %74 = vector.shape_cast %73 : vector<8xf32> to vector<8x1xf32>
    %75 = vector.broadcast %74 : vector<8x1xf32> to vector<8x16xf32>
    %76 = arith.subf %72, %75 : vector<8x16xf32>
    %77 = math.exp %76 : vector<8x16xf32>
    %cst_18 = arith.constant dense<0.000000e+00> : vector<8xf32>
    %78 = vector.multi_reduction <add>, %77, %cst_18 [1] : vector<8x16xf32> to vector<8xf32>
    %79 = vector.shape_cast %78 : vector<8xf32> to vector<8x1xf32>
    %80 = math.log %79 : vector<8x1xf32>
    %81 = vector.broadcast %80 : vector<8x1xf32> to vector<8x16xf32>
    %82 = arith.subf %76, %81 : vector<8x16xf32>
    %83 = vector.extract_strided_slice %5 {offsets = [0, 112], sizes = [8, 16], strides = [1, 1]} : vector<8x128xf32> to vector<8x16xf32>
    %cst_19 = arith.constant dense<0xFF800000> : vector<8xf32>
    %84 = vector.multi_reduction <maximumf>, %83, %cst_19 [1] : vector<8x16xf32> to vector<8xf32>
    %85 = vector.shape_cast %84 : vector<8xf32> to vector<8x1xf32>
    %86 = vector.broadcast %85 : vector<8x1xf32> to vector<8x16xf32>
    %87 = arith.subf %83, %86 : vector<8x16xf32>
    %88 = math.exp %87 : vector<8x16xf32>
    %cst_20 = arith.constant dense<0.000000e+00> : vector<8xf32>
    %89 = vector.multi_reduction <add>, %88, %cst_20 [1] : vector<8x16xf32> to vector<8xf32>
    %90 = vector.shape_cast %89 : vector<8xf32> to vector<8x1xf32>
    %91 = math.log %90 : vector<8x1xf32>
    %92 = vector.broadcast %91 : vector<8x1xf32> to vector<8x16xf32>
    %93 = arith.subf %87, %92 : vector<8x16xf32>
    %94 = tpu.concatenate %16, %27, %38, %49, %60, %71, %82, %93 in 1 : vector<8x16xf32>, vector<8x16xf32>, vector<8x16xf32>, vector<8x16xf32>, vector<8x16xf32>, vector<8x16xf32>, vector<8x16xf32>, vector<8x16xf32> -> vector<8x128xf32>
    %c0_21 = arith.constant 0 : index
    %c0_22 = arith.constant 0 : index
    %95 = vector.load %arg4[%c0_21, %c0_22] : memref<8x128xf32, #tpu.memory_space<vmem>>, vector<8x128xf32>
    tpu.vector_store %arg4[%c0_21, %c0_22], %94 {strides = array<i32>} : memref<8x128xf32, #tpu.memory_space<vmem>>, vector<8x128xf32>,
    return
  }
  func.func @transform_0(%arg0: i32) -> (i32, i32) {
    %c0_i32 = arith.constant 0 : i32
    %c0_i32_0 = arith.constant 0 : i32
    return %arg0, %c0_i32 : i32, i32
  }
  func.func @transform_1(%arg0: i32) -> (i32, i32) {
    %c0_i32 = arith.constant 0 : i32
    %c0_i32_0 = arith.constant 0 : i32
    %c0_i32_1 = arith.constant 0 : i32
    return %c0_i32, %c0_i32_0 : i32, i32
  }
  func.func @transform_2(%arg0: i32) -> (i32, i32) {
    %c0_i32 = arith.constant 0 : i32
    %c0_i32_0 = arith.constant 0 : i32
    %c0_i32_1 = arith.constant 0 : i32
    return %c0_i32, %c0_i32_0 : i32, i32
  }
  func.func @transform_3(%arg0: i32) -> (i32, i32) {
    %c0_i32 = arith.constant 0 : i32
    %c0_i32_0 = arith.constant 0 : i32
    return %arg0, %c0_i32 : i32, i32
  }
}

</mosaic_0001>

<llo_original>
// kernel: tpu_custom_call.1
$region0: #{tpu_custom_call.1}
  #allocation0 [shape = 'u32[]', space=smem, size = 0x4, offset = 0x4, fixed_abs, tag = 'smem constant byte address 0x4 - core index']
  #allocation1 [shape = 'u32[72,128]{1,0:T(1,128)}', space=vmem, size = 0x9000, scoped, tag = 'internal scratch']
  %s0 = inlined_call_operand.hbm [shape: f32[8,256], index: 0, kind: input, shape index: {}]
  %s1 = inlined_call_operand.hbm [shape: f32[256,128], index: 1, kind: input, shape index: {}]
  %s2 = inlined_call_operand.vmem [shape: f32[1,128], index: 2, kind: input, shape index: {}]
  %s3 = inlined_call_operand.hbm [shape: f32[8,128], index: 3, kind: output, shape index: {}]
  %s4 = sld [smem:[#allocation0]]
  $region30: #{tpu_custom_call.1} parent=0
    _
  %s6 = ssub.s32 1, %s4
  %s7 = scalar_select 0, %s6, %s4
  $region1: #{tpu_custom_call.1} parent=0
    #allocation2 [shape = 'u8[8192]{0}', space=vmem, size = 0x2000, scoped, tag = 'input window, operand 0, single buffered']
    #allocation3 [shape = 's32[1]{0}', space=sflag, size = 0x4, scoped, tag = 'scoped memory for tpu_custom_call.1']
    #allocation4 [shape = 's32[1]{0}', space=sflag, size = 0x4, scoped, tag = 'scoped memory for tpu_custom_call.1']
    #allocation5 [shape = 'u8[131072]{0}', space=vmem, size = 0x20000, scoped, tag = 'input window, operand 1, single buffered']
    #allocation6 [shape = 's32[1]{0}', space=sflag, size = 0x4, scoped, tag = 'scoped memory for tpu_custom_call.1']
    #allocation7 [shape = 'u8[4096]{0}', space=vmem, size = 0x1000, scoped, tag = 'output window, operand 0, single buffered']
    %8 = vsyncpa [#allocation3], 0
    %9 = vsyncpa [#allocation6], 0
    %10 = vsyncpa [#allocation4], 0
    // Predicated region
    $region2: #{tpu_custom_call.1} parent=1 // pred_check
      _
    $region3: #{tpu_custom_call.1} parent=1 // pred_check_branch
      %12 = sbr.rel (0) target = $region5
    $region4: #{tpu_custom_call.1} parent=1 // pred_region
      %14 = vsyncadd [#allocation3], 0
      %s16 = sshll.u32 %s0, 4
      %s17 = int_to_ptr.hbm [resolvable:$true] %s16
      %s18 = sshll.u32 [#allocation2], 4
      %s19 = int_to_ptr.vmem [resolvable:$true] %s18
      %21 = dma.hbm_to_vmem [thread:$0]  %s17, 256, %s19, [#allocation3]
    $region5: #{tpu_custom_call.1} parent=1 // pred_fallthru
      _
    // Predicated region
    $region6: #{tpu_custom_call.1} parent=1 // pred_check
      _
    $region7: #{tpu_custom_call.1} parent=1 // pred_check_branch
      %23 = sbr.rel (0) target = $region9
    $region8: #{tpu_custom_call.1} parent=1 // pred_region
      %25 = vsyncadd [#allocation6], 0
      %s26 = sshll.u32 %s1, 4
      %s27 = int_to_ptr.hbm [resolvable:$true] %s26
      %s28 = sshll.u32 [#allocation5], 4
      %s29 = int_to_ptr.vmem [resolvable:$true] %s28
      %34 = dma.hbm_to_vmem [thread:$0]  %s27, 4096, %s29, [#allocation6], 128, 128, 8
    $region9: #{tpu_custom_call.1} parent=1 // pred_fallthru
      _
    // Predicated region
    $region10: #{tpu_custom_call.1} parent=1 // pred_check
      _
    $region11: #{tpu_custom_call.1} parent=1 // pred_check_branch
      %36 = sbr.rel (0) target = $region13
    $region12: #{tpu_custom_call.1} parent=1 // pred_region
      _
    $region13: #{tpu_custom_call.1} parent=1 // pred_fallthru
      _
    // Predicated region
    $region14: #{tpu_custom_call.1} parent=1 // pred_check
      _
    $region15: #{tpu_custom_call.1} parent=1 // pred_check_branch
      %38 = sbr.rel (0) target = $region17
    $region16: #{tpu_custom_call.1} parent=1 // pred_region
      %40 = dma.done [#allocation3], 256
    $region17: #{tpu_custom_call.1} parent=1 // pred_fallthru
      _
    // Predicated region
    $region18: #{tpu_custom_call.1} parent=1 // pred_check
      _
    $region19: #{tpu_custom_call.1} parent=1 // pred_check_branch
      %42 = sbr.rel (0) target = $region21
    $region20: #{tpu_custom_call.1} parent=1 // pred_region
      %44 = dma.done [#allocation6], 4096
    $region21: #{tpu_custom_call.1} parent=1 // pred_fallthru
      _
    %v45 = vld [vmem:[#allocation2] sm:$0xff]
    %v46 = vld [vmem:[#allocation2 + $0x8] sm:$0xff]
    %v47 = vld [vmem:[#allocation5] sm:$0xff]
    %v48 = vld [vmem:[#allocation5 + $0x8] sm:$0xff]
    %v49 = vld [vmem:[#allocation5 + $0x10] sm:$0xff]
    %v50 = vld [vmem:[#allocation5 + $0x18] sm:$0xff]
    %v51 = vld [vmem:[#allocation5 + $0x20] sm:$0xff]
    %v52 = vld [vmem:[#allocation5 + $0x28] sm:$0xff]
    %v53 = vld [vmem:[#allocation5 + $0x30] sm:$0xff]
    %v54 = vld [vmem:[#allocation5 + $0x38] sm:$0xff]
    %v55 = vld [vmem:[#allocation5 + $0x40] sm:$0xff]
    %v56 = vld [vmem:[#allocation5 + $0x48] sm:$0xff]
    %v57 = vld [vmem:[#allocation5 + $0x50] sm:$0xff]
    %v58 = vld [vmem:[#allocation5 + $0x58] sm:$0xff]
    %v59 = vld [vmem:[#allocation5 + $0x60] sm:$0xff]
    %v60 = vld [vmem:[#allocation5 + $0x68] sm:$0xff]
    %v61 = vld [vmem:[#allocation5 + $0x70] sm:$0xff]
    %v62 = vld [vmem:[#allocation5 + $0x78] sm:$0xff]
    %v63 = vld [vmem:[#allocation5 + $0x80] sm:$0xff]
    %v64 = vld [vmem:[#allocation5 + $0x88] sm:$0xff]
    %v65 = vld [vmem:[#allocation5 + $0x90] sm:$0xff]
    %v66 = vld [vmem:[#allocation5 + $0x98] sm:$0xff]
    %v67 = vld [vmem:[#allocation5 + $0xa0] sm:$0xff]
    %v68 = vld [vmem:[#allocation5 + $0xa8] sm:$0xff]
    %v69 = vld [vmem:[#allocation5 + $0xb0] sm:$0xff]
    %v70 = vld [vmem:[#allocation5 + $0xb8] sm:$0xff]
    %v71 = vld [vmem:[#allocation5 + $0xc0] sm:$0xff]
    %v72 = vld [vmem:[#allocation5 + $0xc8] sm:$0xff]
    %v73 = vld [vmem:[#allocation5 + $0xd0] sm:$0xff]
    %v74 = vld [vmem:[#allocation5 + $0xd8] sm:$0xff]
    %v75 = vld [vmem:[#allocation5 + $0xe0] sm:$0xff]
    %v76 = vld [vmem:[#allocation5 + $0xe8] sm:$0xff]
    %v77 = vld [vmem:[#allocation5 + $0xf0] sm:$0xff]
    %v78 = vld [vmem:[#allocation5 + $0xf8] sm:$0xff]
    %v79 = vld [vmem:[%s2] sm:$0x1]
    %v81 = vperm.slane %v79, 0
    %83 = vmatpush.msra.mxu0 %v62
    %84 = vmatpush.msra.mxu0 %v61
    %85 = vmatpush.msra.mxu0 %v60
    %86 = vmatpush.msra.mxu0 %v59
    %87 = vmatpush.msra.mxu0 %v58
    %88 = vmatpush.msra.mxu0 %v57
    %89 = vmatpush.msra.mxu0 %v56
    %90 = vmatpush.msra.mxu0 %v55
    %91 = vmatpush.msra.mxu0 %v54
    %92 = vmatpush.msra.mxu0 %v53
    %93 = vmatpush.msra.mxu0 %v52
    %94 = vmatpush.msra.mxu0 %v51
    %95 = vmatpush.msra.mxu0 %v50
    %96 = vmatpush.msra.mxu0 %v49
    %97 = vmatpush.msra.mxu0 %v48
    %98 = vmatpush.msra.mxu0 %v47
    %99 = vmatmul.f32.gmra.mxu0 %v45
    %v100 = vpop.f32.mrf.mxu0
    %v101 = vadd.f32 %v81, %v100
    %102 = vdwg.mxu0
    %103 = vmatpush.msra.mxu0 %v78
    %104 = vmatpush.msra.mxu0 %v77
    %105 = vmatpush.msra.mxu0 %v76
    %106 = vmatpush.msra.mxu0 %v75
    %107 = vmatpush.msra.mxu0 %v74
    %108 = vmatpush.msra.mxu0 %v73
    %109 = vmatpush.msra.mxu0 %v72
    %110 = vmatpush.msra.mxu0 %v71
    %111 = vmatpush.msra.mxu0 %v70
    %112 = vmatpush.msra.mxu0 %v69
    %113 = vmatpush.msra.mxu0 %v68
    %114 = vmatpush.msra.mxu0 %v67
    %115 = vmatpush.msra.mxu0 %v66
    %116 = vmatpush.msra.mxu0 %v65
    %117 = vmatpush.msra.mxu0 %v64
    %118 = vmatpush.msra.mxu0 %v63
    %119 = vmatmul.f32.gmra.mxu0 %v46
    %v120 = vpop.f32.mrf.mxu0
    %v121 = vadd.f32 %v101, %v120
    %122 = vdwg.mxu0
    %vm123 = vcmask 130048
    %v124 = vsel %vm123, %v121, -inf
    %125 = vmax.xlane.f32.xlu0 %v124
    %v126 = vpop.xlane.xlu0 %125
    %v127 = vsub.f32 %v121, %v126
    %v128 = vmul.f32 %v127, 1.442695
    %v129 = vpow.pop %v128
    %v130 = vsel %vm123, %v129, 0.0
    %131 = vadd.xlane.f32.xlu0 %v130
    %v132 = vpop.xlane.xlu0 %131
    %v133 = vlog2.pop %v132
    %v134 = vmul.f32 %v133, 0.6931472
    %v135 = vsub.f32 %v127, %v134
    %vm136 = vcmask 261248
    %v137 = vsel %vm136, %v121, -inf
    %138 = vmax.xlane.f32.xlu0 %v137
    %v139 = vpop.xlane.xlu0 %138
    %v140 = vsub.f32 %v121, %v139
    %v141 = vmul.f32 %v140, 1.442695
    %v142 = vpow.pop %v141
    %144 = vrot.lane.b32.xlu0 %v142, 112
    %v145 = vpop.permute.xlu0 %144
    %v147 = vsel %vm123, %v145, 0.0
    %148 = vadd.xlane.f32.xlu0 %v147
    %v149 = vpop.xlane.xlu0 %148
    %v150 = vlog2.pop %v149
    %v151 = vmul.f32 %v150, 0.6931472
    %v152 = vsub.f32 %v140, %v151
    %vm153 = vcmask 392448
    %v154 = vsel %vm153, %v121, -inf
    %155 = vmax.xlane.f32.xlu0 %v154
    %v156 = vpop.xlane.xlu0 %155
    %v157 = vsub.f32 %v121, %v156
    %v158 = vmul.f32 %v157, 1.442695
    %v159 = vpow.pop %v158
    %161 = vrot.lane.b32.xlu0 %v159, 96
    %v162 = vpop.permute.xlu0 %161
    %v164 = vsel %vm123, %v162, 0.0
    %165 = vadd.xlane.f32.xlu0 %v164
    %v166 = vpop.xlane.xlu0 %165
    %v167 = vlog2.pop %v166
    %v168 = vmul.f32 %v167, 0.6931472
    %v169 = vsub.f32 %v157, %v168
    %vm170 = vcmask 523648
    %v171 = vsel %vm170, %v121, -inf
    %172 = vmax.xlane.f32.xlu0 %v171
    %v173 = vpop.xlane.xlu0 %172
    %v174 = vsub.f32 %v121, %v173
    %v175 = vmul.f32 %v174, 1.442695
    %v176 = vpow.pop %v175
    %178 = vrot.lane.b32.xlu0 %v176, 80
    %v179 = vpop.permute.xlu0 %178
    %v181 = vsel %vm123, %v179, 0.0
    %182 = vadd.xlane.f32.xlu0 %v181
    %v183 = vpop.xlane.xlu0 %182
    %v184 = vlog2.pop %v183
    %v185 = vmul.f32 %v184, 0.6931472
    %v186 = vsub.f32 %v174, %v185
    %vm187 = vcmask 654848
    %v188 = vsel %vm187, %v121, -inf
    %189 = vmax.xlane.f32.xlu0 %v188
    %v190 = vpop.xlane.xlu0 %189
    %v191 = vsub.f32 %v121, %v190
    %v192 = vmul.f32 %v191, 1.442695
    %v193 = vpow.pop %v192
    %195 = vrot.lane.b32.xlu0 %v193, 64
    %v196 = vpop.permute.xlu0 %195
    %v198 = vsel %vm123, %v196, 0.0
    %199 = vadd.xlane.f32.xlu0 %v198
    %v200 = vpop.xlane.xlu0 %199
    %v201 = vlog2.pop %v200
    %v202 = vmul.f32 %v201, 0.6931472
    %v203 = vsub.f32 %v191, %v202
    %vm204 = vcmask 786048
    %v205 = vsel %vm204, %v121, -inf
    %206 = vmax.xlane.f32.xlu0 %v205
    %v207 = vpop.xlane.xlu0 %206
    %v208 = vsub.f32 %v121, %v207
    %v209 = vmul.f32 %v208, 1.442695
    %v210 = vpow.pop %v209
    %212 = vrot.lane.b32.xlu0 %v210, 48
    %v213 = vpop.permute.xlu0 %212
    %v215 = vsel %vm123, %v213, 0.0
    %216 = vadd.xlane.f32.xlu0 %v215
    %v217 = vpop.xlane.xlu0 %216
    %v218 = vlog2.pop %v217
    %v219 = vmul.f32 %v218, 0.6931472
    %v220 = vsub.f32 %v208, %v219
    %vm221 = vcmask 917248
    %v222 = vsel %vm221, %v121, -inf
    %223 = vmax.xlane.f32.xlu0 %v222
    %v224 = vpop.xlane.xlu0 %223
    %v225 = vsub.f32 %v121, %v224
    %v226 = vmul.f32 %v225, 1.442695
    %v227 = vpow.pop %v226
    %229 = vrot.lane.b32.xlu0 %v227, 32
    %v230 = vpop.permute.xlu0 %229
    %v232 = vsel %vm123, %v230, 0.0
    %233 = vadd.xlane.f32.xlu0 %v232
    %v234 = vpop.xlane.xlu0 %233
    %v235 = vlog2.pop %v234
    %v236 = vmul.f32 %v235, 0.6931472
    %v237 = vsub.f32 %v225, %v236
    %vm238 = vcmask 1048448
    %v239 = vsel %vm238, %v121, -inf
    %240 = vmax.xlane.f32.xlu0 %v239
    %v241 = vpop.xlane.xlu0 %240
    %v242 = vsub.f32 %v121, %v241
    %v243 = vmul.f32 %v242, 1.442695
    %v244 = vpow.pop %v243
    %246 = vrot.lane.b32.xlu0 %v244, 16
    %v247 = vpop.permute.xlu0 %246
    %v249 = vsel %vm123, %v247, 0.0
    %250 = vadd.xlane.f32.xlu0 %v249
    %v251 = vpop.xlane.xlu0 %250
    %v252 = vlog2.pop %v251
    %v253 = vmul.f32 %v252, 0.6931472
    %v254 = vsub.f32 %v242, %v253
    %v255 = vsel %vm123, %v135, %v152
    %vm256 = vcmask 261120
    %v257 = vsel %vm256, %v255, %v169
    %vm258 = vcmask 392192
    %v259 = vsel %vm258, %v257, %v186
    %vm260 = vcmask 523264
    %v261 = vsel %vm260, %v259, %v203
    %vm262 = vcmask 654336
    %v263 = vsel %vm262, %v261, %v220
    %vm264 = vcmask 785408
    %v265 = vsel %vm264, %v263, %v237
    %vm266 = vcmask 916480
    %v267 = vsel %vm266, %v265, %v254
    %268 = vst [vmem:[#allocation7] sm:$0xff] %v267
    // Predicated region
    $region22: #{tpu_custom_call.1} parent=1 // pred_check
      _
    $region23: #{tpu_custom_call.1} parent=1 // pred_check_branch
      %270 = sbr.rel (0) target = $region25
    $region24: #{tpu_custom_call.1} parent=1 // pred_region
      %272 = vsyncadd [#allocation4], 0
      %s274 = sshll.u32 [#allocation7], 4
      %s275 = int_to_ptr.vmem [resolvable:$true] %s274
      %s276 = sshll.u32 %s3, 4
      %s277 = int_to_ptr.hbm [resolvable:$true] %s276
      %279 = dma.vmem_to_hbm [thread:$0]  %s275, 128, %s277, [#allocation4]
    $region25: #{tpu_custom_call.1} parent=1 // pred_fallthru
      _
    // Predicated region
    $region26: #{tpu_custom_call.1} parent=1 // pred_check
      _
    $region27: #{tpu_custom_call.1} parent=1 // pred_check_branch
      %281 = sbr.rel (0) target = $region29
    $region28: #{tpu_custom_call.1} parent=1 // pred_region
      %283 = dma.done [#allocation4], 128
    $region29: #{tpu_custom_call.1} parent=1 // pred_fallthru
      _
    %284 = vsyncpa [#allocation3], 1
    %285 = vsyncpa [#allocation6], 1
    %286 = vsyncpa [#allocation4], 1

</llo_original>
